<compile_context>
chip_gen: v7x
topology: tpu7x:2x2x1
jax: 0.10.0
libtpu: 0.0.40
codegen_flags: <defaults>
</compile_context>

<pallas_src>
import functools

import jax
import jax.numpy as jnp
from jax.experimental import pallas as pl
from jax.experimental.pallas import tpu as pltpu


def _round_up(v, m):
    return (v + m - 1) // m * m


def _fc_stats_kernel(x_ref, w_ref, y_ref, stats_ref, acc_ref):
    # grid = (j: feature tiles [parallel], i: row tiles, k: reduction tiles)
    i = pl.program_id(1)
    k = pl.program_id(2)
    nk = pl.num_programs(2)

    # stats block (sum, sumsq) stays resident across (i, k) for a fixed j.
    @pl.when(jnp.logical_and(i == 0, k == 0))
    def _():
        stats_ref[...] = jnp.zeros_like(stats_ref)

    @pl.when(k == 0)
    def _():
        acc_ref[...] = jnp.zeros_like(acc_ref)

    acc_ref[...] += jnp.dot(x_ref[...], w_ref[...],
                            preferred_element_type=jnp.float32)

    @pl.when(k == nk - 1)
    def _():
        y = acc_ref[...]                              # (TM, TN) f32
        y_ref[...] = y.astype(y_ref.dtype)
        s = jnp.sum(y, axis=0, keepdims=True)         # (1, TN)  XLU reduce
        sq = jnp.sum(y * y, axis=0, keepdims=True)    # (1, TN)
        stats_ref[...] += jnp.concatenate([s, sq], axis=0)


def _bn_relu_kernel(y_ref, stats_ref, gamma_ref, beta_ref, o_ref, *,
                    n_valid, eps):
    stats = stats_ref[...]                            # (2, TN) f32
    inv_n = 1.0 / n_valid
    mean = stats[0:1, :] * inv_n
    var = stats[1:2, :] * inv_n - mean * mean
    var = jnp.maximum(var, 0.0)
    # Fold BN into one scale/shift: a*y + b (2 VPU ops/element + a max).
    # rsqrt goes to the EUP slot; this per-tile prologue is O(TN) and hidden
    # under the O(TM*TN) elementwise body.
    a = gamma_ref[...] * jax.lax.rsqrt(var + eps)     # (1, TN)
    b = beta_ref[...] - mean * a                      # (1, TN)
    y = y_ref[...].astype(jnp.float32)
    o_ref[...] = jnp.maximum(y * a + b, 0.0).astype(o_ref.dtype)


def dense_block(x, weight, gamma, beta, *, eps=1e-5):
    """ReLU(BatchNorm1d(x @ weight.T)) with BN training-mode batch statistics.

    x:      (N, in_features)
    weight: (out_features, in_features)   (torch nn.Linear layout, bias=False)
    gamma, beta: (out_features,)
    """
    n, kdim = x.shape
    fdim = weight.shape[0]

    # Tile sizes: (8,128)-aligned, as large as comfortably fits scoped VMEM.
    tm = min(512, _round_up(n, 8))
    tk = min(512, _round_up(kdim, 128))
    tn = min(512, _round_up(fdim, 128))
    m_pad = _round_up(n, tm)
    k_pad = _round_up(kdim, tk)
    f_pad = _round_up(fdim, tn)

    # Only materialize padding copies when the shapes are not tile-aligned.
    if (m_pad, k_pad) != (n, kdim):
        x_p = jnp.pad(x, ((0, m_pad - n), (0, k_pad - kdim)))
    else:
        x_p = x
    w_t = weight.T
    if (k_pad, f_pad) != (kdim, fdim):
        w_t = jnp.pad(w_t, ((0, k_pad - kdim), (0, f_pad - fdim)))
    gamma_p = gamma.astype(jnp.float32)
    beta_p = beta.astype(jnp.float32)
    if f_pad != fdim:
        gamma_p = jnp.pad(gamma_p, (0, f_pad - fdim))
        beta_p = jnp.pad(beta_p, (0, f_pad - fdim))
    gamma_p = gamma_p.reshape(1, f_pad)
    beta_p = beta_p.reshape(1, f_pad)

    # ---- Pass 1: fc + per-feature sum / sumsq -------------------------------
    grid1 = (f_pad // tn, m_pad // tm, k_pad // tk)
    y_p, stats = pl.pallas_call(
        _fc_stats_kernel,
        out_shape=(
            jax.ShapeDtypeStruct((m_pad, f_pad), x.dtype),
            jax.ShapeDtypeStruct((2, f_pad), jnp.float32),
        ),
        grid=grid1,
        in_specs=[
            pl.BlockSpec((tm, tk), lambda j, i, k: (i, k)),
            pl.BlockSpec((tk, tn), lambda j, i, k: (k, j)),
        ],
        out_specs=(
            pl.BlockSpec((tm, tn), lambda j, i, k: (i, j)),
            pl.BlockSpec((2, tn), lambda j, i, k: (0, j)),
        ),
        scratch_shapes=[pltpu.VMEM((tm, tn), jnp.float32)],
        compiler_params=pltpu.CompilerParams(
            dimension_semantics=("parallel", "arbitrary", "arbitrary")),
    )(x_p, w_t)

    # ---- Pass 2: normalize (single scale/shift) + ReLU ----------------------
    grid2 = (m_pad // tm, f_pad // tn)
    kernel2 = functools.partial(_bn_relu_kernel, n_valid=float(n), eps=eps)
    out_p = pl.pallas_call(
        kernel2,
        out_shape=jax.ShapeDtypeStruct((m_pad, f_pad), x.dtype),
        grid=grid2,
        in_specs=[
            pl.BlockSpec((tm, tn), lambda i, j: (i, j)),
            pl.BlockSpec((2, tn), lambda i, j: (0, j)),
            pl.BlockSpec((1, tn), lambda i, j: (0, j)),
            pl.BlockSpec((1, tn), lambda i, j: (0, j)),
        ],
        out_specs=pl.BlockSpec((tm, tn), lambda i, j: (i, j)),
        compiler_params=pltpu.CompilerParams(
            dimension_semantics=("parallel", "parallel")),
    )(y_p, stats, gamma_p, beta_p)

    if (m_pad, f_pad) != (n, fdim):
        out_p = out_p[:n, :fdim]
    return out_p


def _reference(x, weight, gamma, beta, eps=1e-5):
    # Pure-JAX reference of Linear(bias=False) + BatchNorm1d(training) + ReLU.
    y = x @ weight.T
    mean = jnp.mean(y, axis=0, keepdims=True)
    var = jnp.mean((y - mean) ** 2, axis=0, keepdims=True)
    yn = gamma * (y - mean) / jnp.sqrt(var + eps) + beta
    return jnp.maximum(yn, 0.0)


if __name__ == "__main__":
    key = jax.random.PRNGKey(0)
    kx, kw, kg, kb = jax.random.split(key, 4)

    N, IN_F, OUT_F = 8, 32, 32
    x = jax.random.normal(kx, (N, IN_F), dtype=jnp.float32)
    weight = 0.1 * jax.random.normal(kw, (OUT_F, IN_F), dtype=jnp.float32)
    # Non-trivial affine params (torch default is gamma=1, beta=0).
    gamma = 1.0 + 0.1 * jax.random.normal(kg, (OUT_F,), dtype=jnp.float32)
    beta = 0.1 * jax.random.normal(kb, (OUT_F,), dtype=jnp.float32)

    out = dense_block(x, weight, gamma, beta, eps=1e-5)
    out = jax.block_until_ready(out)

    ref = _reference(x, weight, gamma, beta, eps=1e-5)
    assert out.shape == (N, OUT_F)
    assert jnp.allclose(out, ref, atol=1e-4, rtol=1e-4), \
        float(jnp.max(jnp.abs(out - ref)))

    print("KERNEL_OK")
</pallas_src>

<mosaic_0001>
module attributes {stable_mosaic.version = 11 : i64} {
  func.func @_fc_stats_kernel(%arg0: i32, %arg1: i32, %arg2: i32, %arg3: memref<8x128xf32, #tpu.memory_space<vmem>>, %arg4: memref<128x128xf32, #tpu.memory_space<vmem>>, %arg5: memref<8x128xf32, #tpu.memory_space<vmem>>, %arg6: memref<2x128xf32, #tpu.memory_space<vmem>>, %arg7: memref<8x128xf32, #tpu.memory_space<vmem>>) attributes {dimension_semantics = [#tpu.dimension_semantics<parallel>, #tpu.dimension_semantics<arbitrary>, #tpu.dimension_semantics<arbitrary>], iteration_bounds = array<i64: 1, 1, 1>, scalar_prefetch = 0 : i64, scratch_operands = 1 : i64, tpu.core_type = #tpu.core_type<tc>, window_params = [{transform_indices = @transform_0, window_bounds = array<i64: 8, 128>}, {transform_indices = @transform_1, window_bounds = array<i64: 128, 128>}, {transform_indices = @transform_2, window_bounds = array<i64: 8, 128>}, {transform_indices = @transform_3, window_bounds = array<i64: 2, 128>}]} {
    %c0_i32 = arith.constant 0 : i32
    %0 = arith.cmpi eq, %arg1, %c0_i32 : i32
    %c0_i32_0 = arith.constant 0 : i32
    %1 = arith.cmpi eq, %arg2, %c0_i32_0 : i32
    %2 = arith.andi %0, %1 : i1
    %3 = arith.extui %2 : i1 to i32
    %c0_i32_1 = arith.constant 0 : i32
    %4 = arith.cmpi ne, %3, %c0_i32_1 : i32
    scf.if %4 {
      %cst_13 = arith.constant 0.000000e+00 : f32
      %17 = vector.broadcast %cst_13 : f32 to vector<2x128xf32>
      %c0_14 = arith.constant 0 : index
      %c0_15 = arith.constant 0 : index
      %18 = vector.load %arg6[%c0_14, %c0_15] : memref<2x128xf32, #tpu.memory_space<vmem>>, vector<2x128xf32>
      tpu.vector_store %arg6[%c0_14, %c0_15], %17 {strides = array<i32>} : memref<2x128xf32, #tpu.memory_space<vmem>>, vector<2x128xf32>,
    } else {
    }
    %c0_i32_2 = arith.constant 0 : i32
    %5 = arith.cmpi eq, %arg2, %c0_i32_2 : i32
    %6 = arith.extui %5 : i1 to i32
    %c0_i32_3 = arith.constant 0 : i32
    %7 = arith.cmpi ne, %6, %c0_i32_3 : i32
    scf.if %7 {
      %cst_13 = arith.constant 0.000000e+00 : f32
      %17 = vector.broadcast %cst_13 : f32 to vector<8x128xf32>
      %c0_14 = arith.constant 0 : index
      %c0_15 = arith.constant 0 : index
      %18 = vector.load %arg7[%c0_14, %c0_15] : memref<8x128xf32, #tpu.memory_space<vmem>>, vector<8x128xf32>
      tpu.vector_store %arg7[%c0_14, %c0_15], %17 {strides = array<i32>} : memref<8x128xf32, #tpu.memory_space<vmem>>, vector<8x128xf32>,
    } else {
    }
    %c0 = arith.constant 0 : index
    %c0_4 = arith.constant 0 : index
    %8 = vector.load %arg7[%c0, %c0_4] : memref<8x128xf32, #tpu.memory_space<vmem>>, vector<8x128xf32>
    %c0_5 = arith.constant 0 : index
    %c0_6 = arith.constant 0 : index
    %9 = vector.load %arg3[%c0_5, %c0_6] : memref<8x128xf32, #tpu.memory_space<vmem>>, vector<8x128xf32>
    %c0_7 = arith.constant 0 : index
    %c0_8 = arith.constant 0 : index
    %10 = vector.load %arg4[%c0_7, %c0_8] : memref<128x128xf32, #tpu.memory_space<vmem>>, vector<128x128xf32>
    %cst = arith.constant dense<0.000000e+00> : vector<8x128xf32>
    %11 = tpu.matmul %9, %10, %cst {dimension_numbers = #tpu.dot_dimension_numbers<[1], [0], [0], [1], [0, 0, 1, 1], [], []>} : vector<8x128xf32>, vector<128x128xf32>, vector<8x128xf32> -> vector<8x128xf32>
    %12 = arith.addf %8, %11 : vector<8x128xf32>
    %c0_9 = arith.constant 0 : index
    %c0_10 = arith.constant 0 : index
    %13 = vector.load %arg7[%c0_9, %c0_10] : memref<8x128xf32, #tpu.memory_space<vmem>>, vector<8x128xf32>
    tpu.vector_store %arg7[%c0_9, %c0_10], %12 {strides = array<i32>} : memref<8x128xf32, #tpu.memory_space<vmem>>, vector<8x128xf32>,
    %c0_i32_11 = arith.constant 0 : i32
    %14 = arith.cmpi eq, %arg2, %c0_i32_11 : i32
    %15 = arith.extui %14 : i1 to i32
    %c0_i32_12 = arith.constant 0 : i32
    %16 = arith.cmpi ne, %15, %c0_i32_12 : i32
    scf.if %16 {
      %c0_13 = arith.constant 0 : index
      %c0_14 = arith.constant 0 : index
      %17 = vector.load %arg7[%c0_13, %c0_14] : memref<8x128xf32, #tpu.memory_space<vmem>>, vector<8x128xf32>
      %c0_15 = arith.constant 0 : index
      %c0_16 = arith.constant 0 : index
      %18 = vector.load %arg5[%c0_15, %c0_16] : memref<8x128xf32, #tpu.memory_space<vmem>>, vector<8x128xf32>
      tpu.vector_store %arg5[%c0_15, %c0_16], %17 {strides = array<i32>} : memref<8x128xf32, #tpu.memory_space<vmem>>, vector<8x128xf32>,
      %cst_17 = arith.constant dense<0.000000e+00> : vector<128xf32>
      %19 = vector.multi_reduction <add>, %17, %cst_17 [0] : vector<8x128xf32> to vector<128xf32>
      %20 = vector.shape_cast %19 : vector<128xf32> to vector<1x128xf32>
      %21 = arith.mulf %17, %17 : vector<8x128xf32>
      %cst_18 = arith.constant dense<0.000000e+00> : vector<128xf32>
      %22 = vector.multi_reduction <add>, %21, %cst_18 [0] : vector<8x128xf32> to vector<128xf32>
      %23 = vector.shape_cast %22 : vector<128xf32> to vector<1x128xf32>
      %c0_19 = arith.constant 0 : index
      %c0_20 = arith.constant 0 : index
      %24 = vector.load %arg6[%c0_19, %c0_20] : memref<2x128xf32, #tpu.memory_space<vmem>>, vector<2x128xf32>
      %25 = tpu.concatenate %20, %23 in 0 : vector<1x128xf32>, vector<1x128xf32> -> vector<2x128xf32>
      %26 = arith.addf %24, %25 : vector<2x128xf32>
      %c0_21 = arith.constant 0 : index
      %c0_22 = arith.constant 0 : index
      %27 = vector.load %arg6[%c0_21, %c0_22] : memref<2x128xf32, #tpu.memory_space<vmem>>, vector<2x128xf32>
      tpu.vector_store %arg6[%c0_21, %c0_22], %26 {strides = array<i32>} : memref<2x128xf32, #tpu.memory_space<vmem>>, vector<2x128xf32>,
    } else {
    }
    return
  }
  func.func @transform_0(%arg0: i32, %arg1: i32, %arg2: i32) -> (i32, i32) {
    %c0_i32 = arith.constant 0 : i32
    return %arg1, %arg2 : i32, i32
  }
  func.func @transform_1(%arg0: i32, %arg1: i32, %arg2: i32) -> (i32, i32) {
    %c0_i32 = arith.constant 0 : i32
    return %arg2, %arg0 : i32, i32
  }
  func.func @transform_2(%arg0: i32, %arg1: i32, %arg2: i32) -> (i32, i32) {
    %c0_i32 = arith.constant 0 : i32
    return %arg1, %arg0 : i32, i32
  }
  func.func @transform_3(%arg0: i32, %arg1: i32, %arg2: i32) -> (i32, i32) {
    %c0_i32 = arith.constant 0 : i32
    %c0_i32_0 = arith.constant 0 : i32
    return %c0_i32, %arg0 : i32, i32
  }
}

</mosaic_0001>

<llo_original>
// kernel: tpu_custom_call.1
$region0: #{tpu_custom_call.1}
  #allocation0 [shape = 'u32[]', space=smem, size = 0x4, offset = 0x4, fixed_abs, tag = 'smem constant byte address 0x4 - core index']
  #allocation1 [shape = 'u32[144,128]{1,0:T(1,128)}', space=vmem, size = 0x12000, scoped, tag = 'internal scratch']
  #allocation2 [shape = 'f32[8,128]{1,0:T(8,128)}', space=vmem, size = 0x1000, scoped, tag = 'scratch operand']
  %s0 = inlined_call_operand.hbm [shape: f32[8,128], index: 0, kind: input, shape index: {}]
  %s1 = inlined_call_operand.hbm [shape: f32[128,128], index: 1, kind: input, shape index: {}]
  %s2 = inlined_call_operand.hbm [shape: f32[8,128], index: 2, kind: output, shape index: {0}]
  %s3 = inlined_call_operand.hbm [shape: f32[2,128], index: 3, kind: output, shape index: {1}]
  %4 = xla_tuple %s2, %s3
  %s5 = sld [smem:[#allocation0]]
  $region46: #{tpu_custom_call.1} parent=0
    _
  %s7 = ssub.s32 1, %s5
  %s8 = scalar_select 0, %s7, %s5
  $region1: #{tpu_custom_call.1} parent=0
    #allocation3 [shape = 'u8[4096]{0}', space=vmem, size = 0x1000, scoped, tag = 'input window, operand 0, single buffered']
    #allocation4 [shape = 's32[1]{0}', space=sflag, size = 0x4, scoped, tag = 'scoped memory for tpu_custom_call.1']
    #allocation5 [shape = 's32[1]{0}', space=sflag, size = 0x4, scoped, tag = 'scoped memory for tpu_custom_call.1']
    #allocation6 [shape = 'u8[65536]{0}', space=vmem, size = 0x10000, scoped, tag = 'input window, operand 1, single buffered']
    #allocation7 [shape = 's32[1]{0}', space=sflag, size = 0x4, scoped, tag = 'scoped memory for tpu_custom_call.1']
    #allocation8 [shape = 'u8[4096]{0}', space=vmem, size = 0x1000, scoped, tag = 'output window, operand 0, single buffered']
    #allocation9 [shape = 'u8[1024]{0}', space=vmem, size = 0x400, scoped, tag = 'output window, operand 1, single buffered']
    #allocation10 [shape = 's32[1]{0}', space=sflag, size = 0x4, scoped, tag = 'scoped memory for tpu_custom_call.1']
    %9 = vsyncpa [#allocation4], 0
    %10 = vsyncpa [#allocation7], 0
    %11 = vsyncpa [#allocation5], 0
    %12 = vsyncpa [#allocation10], 0
    // Predicated region
    $region2: #{tpu_custom_call.1} parent=1 // pred_check
      _
    $region3: #{tpu_custom_call.1} parent=1 // pred_check_branch
      %14 = sbr.rel (0) target = $region5
    $region4: #{tpu_custom_call.1} parent=1 // pred_region
      %s16 = ssub.s32 128, 128
      %17 = vsyncadd [#allocation4], %s16
      %s19 = sshll.u32 [#allocation3], 4
      %s20 = int_to_ptr.vmem [resolvable:$true] %s19
      %22 = dma.hbm_to_vmem [thread:$0]  %s0, 128, %s20, [#allocation4]
    $region5: #{tpu_custom_call.1} parent=1 // pred_fallthru
      _
    // Predicated region
    $region6: #{tpu_custom_call.1} parent=1 // pred_check
      _
    $region7: #{tpu_custom_call.1} parent=1 // pred_check_branch
      %24 = sbr.rel (0) target = $region9
    $region8: #{tpu_custom_call.1} parent=1 // pred_region
      %s26 = ssub.s32 2048, 2048
      %27 = vsyncadd [#allocation7], %s26
      %s28 = sshll.u32 [#allocation6], 4
      %s29 = int_to_ptr.vmem [resolvable:$true] %s28
      %34 = dma.hbm_to_vmem [thread:$0]  %s1, 2048, %s29, [#allocation7], 128, 128, 8
    $region9: #{tpu_custom_call.1} parent=1 // pred_fallthru
      _
    // Predicated region
    $region10: #{tpu_custom_call.1} parent=1 // pred_check
      _
    $region11: #{tpu_custom_call.1} parent=1 // pred_check_branch
      %36 = sbr.rel (0) target = $region13
    $region12: #{tpu_custom_call.1} parent=1 // pred_region
      %37 = dma.done [#allocation4], 128
    $region13: #{tpu_custom_call.1} parent=1 // pred_fallthru
      _
    // Predicated region
    $region14: #{tpu_custom_call.1} parent=1 // pred_check
      _
    $region15: #{tpu_custom_call.1} parent=1 // pred_check_branch
      %39 = sbr.rel (0) target = $region17
    $region16: #{tpu_custom_call.1} parent=1 // pred_region
      %40 = dma.done [#allocation7], 2048
    $region17: #{tpu_custom_call.1} parent=1 // pred_fallthru
      _
    %p41 = scmp.eq.s32.totalorder 0, 0
    %p42 = scmp.eq.s32.totalorder 0, 0
    %p43 = pnand %p41, %p42
    %p44 = pneg %p43
    // Predicated region
    $region18: #{tpu_custom_call.1} parent=1 // pred_check
      _
    $region19: #{tpu_custom_call.1} parent=1 // pred_check_branch
      %46 = sbr.rel (%p43) target = $region21
    $region20: #{tpu_custom_call.1} parent=1 // pred_region
      %47 = vst [vmem:[#allocation9] sm:$0x3] 0.0
    $region21: #{tpu_custom_call.1} parent=1 // pred_fallthru
      _
    // Predicated region
    $region22: #{tpu_custom_call.1} parent=1 // pred_check
      %p48 = pneg %p42
    $region23: #{tpu_custom_call.1} parent=1 // pred_check_branch
      %50 = sbr.rel (%p48) target = $region25
    $region24: #{tpu_custom_call.1} parent=1 // pred_region
      %51 = vst [vmem:[#allocation2] sm:$0xff] 0.0
    $region25: #{tpu_custom_call.1} parent=1 // pred_fallthru
      _
    %v52 = vld [vmem:[#allocation2] sm:$0xff]
    %v53 = vld [vmem:[#allocation3] sm:$0xff]
    %v54 = vld [vmem:[#allocation6] sm:$0xff]
    %v55 = vld [vmem:[#allocation6 + $0x8] sm:$0xff]
    %v56 = vld [vmem:[#allocation6 + $0x10] sm:$0xff]
    %v57 = vld [vmem:[#allocation6 + $0x18] sm:$0xff]
    %v58 = vld [vmem:[#allocation6 + $0x20] sm:$0xff]
    %v59 = vld [vmem:[#allocation6 + $0x28] sm:$0xff]
    %v60 = vld [vmem:[#allocation6 + $0x30] sm:$0xff]
    %v61 = vld [vmem:[#allocation6 + $0x38] sm:$0xff]
    %v62 = vld [vmem:[#allocation6 + $0x40] sm:$0xff]
    %v63 = vld [vmem:[#allocation6 + $0x48] sm:$0xff]
    %v64 = vld [vmem:[#allocation6 + $0x50] sm:$0xff]
    %v65 = vld [vmem:[#allocation6 + $0x58] sm:$0xff]
    %v66 = vld [vmem:[#allocation6 + $0x60] sm:$0xff]
    %v67 = vld [vmem:[#allocation6 + $0x68] sm:$0xff]
    %v68 = vld [vmem:[#allocation6 + $0x70] sm:$0xff]
    %v69 = vld [vmem:[#allocation6 + $0x78] sm:$0xff]
    %70 = vmatprep.subr.mxu0 0.0
    %71 = vmatpush1.msra.mxu0 %v54
    %72 = vmatprep.subr.mxu0 0.0
    %73 = vmatpush1.msra.mxu0 %v55
    %74 = vmatprep.subr.mxu0 0.0
    %75 = vmatpush1.msra.mxu0 %v56
    %76 = vmatprep.subr.mxu0 0.0
    %77 = vmatpush1.msra.mxu0 %v57
    %78 = vmatprep.subr.mxu0 0.0
    %79 = vmatpush1.msra.mxu0 %v58
    %80 = vmatprep.subr.mxu0 0.0
    %81 = vmatpush1.msra.mxu0 %v59
    %82 = vmatprep.subr.mxu0 0.0
    %83 = vmatpush1.msra.mxu0 %v60
    %84 = vmatprep.subr.mxu0 0.0
    %85 = vmatpush1.msra.mxu0 %v61
    %86 = vmatprep.subr.mxu0 0.0
    %87 = vmatpush1.msra.mxu0 %v62
    %88 = vmatprep.subr.mxu0 0.0
    %89 = vmatpush1.msra.mxu0 %v63
    %90 = vmatprep.subr.mxu0 0.0
    %91 = vmatpush1.msra.mxu0 %v64
    %92 = vmatprep.subr.mxu0 0.0
    %93 = vmatpush1.msra.mxu0 %v65
    %94 = vmatprep.subr.mxu0 0.0
    %95 = vmatpush1.msra.mxu0 %v66
    %96 = vmatprep.subr.mxu0 0.0
    %97 = vmatpush1.msra.mxu0 %v67
    %98 = vmatprep.subr.mxu0 0.0
    %99 = vmatpush1.msra.mxu0 %v68
    %100 = vmatprep.subr.mxu0 0.0
    %101 = vmatpush1.msra.mxu0 %v69
    %102 = vmatprep.subr.mxu0 0.0
    %103 = vmatpush1.msra.mxu0 0.0
    %104 = vmatprep.subr.mxu0 0.0
    %105 = vmatpush1.msra.mxu0 0.0
    %106 = vmatprep.subr.mxu0 0.0
    %107 = vmatpush1.msra.mxu0 0.0
    %108 = vmatprep.subr.mxu0 0.0
    %109 = vmatpush1.msra.mxu0 0.0
    %110 = vmatprep.subr.mxu0 0.0
    %111 = vmatpush1.msra.mxu0 0.0
    %112 = vmatprep.subr.mxu0 0.0
    %113 = vmatpush1.msra.mxu0 0.0
    %114 = vmatprep.subr.mxu0 0.0
    %115 = vmatpush1.msra.mxu0 0.0
    %116 = vmatprep.subr.mxu0 0.0
    %117 = vmatpush1.msra.mxu0 0.0
    %118 = vmatprep.subr.mxu0 0.0
    %119 = vmatpush1.msra.mxu0 0.0
    %120 = vmatprep.subr.mxu0 0.0
    %121 = vmatpush1.msra.mxu0 0.0
    %122 = vmatprep.subr.mxu0 0.0
    %123 = vmatpush1.msra.mxu0 0.0
    %124 = vmatprep.subr.mxu0 0.0
    %125 = vmatpush1.msra.mxu0 0.0
    %126 = vmatprep.subr.mxu0 0.0
    %127 = vmatpush1.msra.mxu0 0.0
    %128 = vmatprep.subr.mxu0 0.0
    %129 = vmatpush1.msra.mxu0 0.0
    %130 = vmatprep.subr.mxu0 0.0
    %131 = vmatpush1.msra.mxu0 0.0
    %132 = vmatprep.subr.mxu0 0.0
    %133 = vmatpush1.msra.mxu0 0.0
    %134 = vmatprep.mubr.f32.mxu0 0.0
    %135 = vmatmul.mubr.f32.gmra.mrb[0].mxu0 %v53
    %v136 = vpop.f32.mrb[0].mxu0
    %v137 = vadd.f32 0.0, %v136
    %v138 = vpop.f32.mrb[0].mxu0
    %139 = vdwg.mxu0
    %v140 = vadd.f32 %v52, %v137
    %141 = vst [vmem:[#allocation2] sm:$0xff] %v140
    // Predicated region
    $region26: #{tpu_custom_call.1} parent=1 // pred_check
      %p142 = pneg %p42
    $region27: #{tpu_custom_call.1} parent=1 // pred_check_branch
      %144 = sbr.rel (%p142) target = $region29
    $region28: #{tpu_custom_call.1} parent=1 // pred_region
      %v145 = vld [vmem:[#allocation2] sm:$0xff]
      %146 = vst [vmem:[#allocation8] sm:$0xff] %v145
      %v147 = vrot.slane %v145, 4
      %v148 = vadd.f32 %v145, %v147
      %v149 = vrot.slane %v148, 2
      %v150 = vadd.f32 %v148, %v149
      %v151 = vrot.slane %v150, 1
      %v152 = vadd.f32 %v150, %v151
      %v153 = vmul.f32 %v145, %v145
      %v154 = vrot.slane %v153, 4
      %v155 = vadd.f32 %v153, %v154
      %v156 = vrot.slane %v155, 2
      %v157 = vadd.f32 %v155, %v156
      %v158 = vrot.slane %v157, 1
      %v159 = vadd.f32 %v157, %v158
      %v160 = vld [vmem:[#allocation9] sm:$0x3]
      %vm161 = vcmask 1040384
      %v162 = vsel %vm161, %v152, %v159
      %v163 = vadd.f32 %v160, %v162
      %164 = vst [vmem:[#allocation9] sm:$0x3] %v163
    $region29: #{tpu_custom_call.1} parent=1 // pred_fallthru
      _
    // Predicated region
    $region30: #{tpu_custom_call.1} parent=1 // pred_check
      _
    $region31: #{tpu_custom_call.1} parent=1 // pred_check_branch
      %166 = sbr.rel (0) target = $region33
    $region32: #{tpu_custom_call.1} parent=1 // pred_region
      %s168 = ssub.s32 128, 128
      %169 = vsyncadd [#allocation5], %s168
      %s171 = sshll.u32 [#allocation8], 4
      %s172 = int_to_ptr.vmem [resolvable:$true] %s171
      %174 = dma.vmem_to_hbm [thread:$0]  %s172, 128, %s2, [#allocation5]
    $region33: #{tpu_custom_call.1} parent=1 // pred_fallthru
      _
    // Predicated region
    $region34: #{tpu_custom_call.1} parent=1 // pred_check
      _
    $region35: #{tpu_custom_call.1} parent=1 // pred_check_branch
      %176 = sbr.rel (0) target = $region37
    $region36: #{tpu_custom_call.1} parent=1 // pred_region
      %s178 = ssub.s32 32, 32
      %179 = vsyncadd [#allocation10], %s178
      %s181 = sshll.u32 [#allocation9], 4
      %s182 = int_to_ptr.vmem [resolvable:$true] %s181
      %184 = dma.vmem_to_hbm [thread:$0]  %s182, 32, %s3, [#allocation10]
    $region37: #{tpu_custom_call.1} parent=1 // pred_fallthru
      _
    // Predicated region
    $region38: #{tpu_custom_call.1} parent=1 // pred_check
      _
    $region39: #{tpu_custom_call.1} parent=1 // pred_check_branch
      %186 = sbr.rel (0) target = $region41
    $region40: #{tpu_custom_call.1} parent=1 // pred_region
      %187 = dma.done [#allocation5], 128
    $region41: #{tpu_custom_call.1} parent=1 // pred_fallthru
      _
    // Predicated region
    $region42: #{tpu_custom_call.1} parent=1 // pred_check
      _
    $region43: #{tpu_custom_call.1} parent=1 // pred_check_branch
      %189 = sbr.rel (0) target = $region45
    $region44: #{tpu_custom_call.1} parent=1 // pred_region
      %190 = dma.done [#allocation10], 32
    $region45: #{tpu_custom_call.1} parent=1 // pred_fallthru
      _
    %191 = vsyncpa [#allocation4], 1
    %192 = vsyncpa [#allocation7], 1
    %193 = vsyncpa [#allocation5], 1
    %194 = vsyncpa [#allocation10], 1

</llo_original>
